<compile_context>
chip_gen: v7x
topology: tpu7x:2x2x1
jax: 0.10.0
libtpu: 0.0.40
codegen_flags: <defaults>
</compile_context>

<pallas_src>
import functools

import jax
import jax.numpy as jnp
from jax import lax
from jax.scipy.special import erf as jsp_erf
from jax.experimental import pallas as pl
from jax.experimental.pallas import tpu as pltpu

BN_EPS = 1e-5
_INV_SQRT2 = 0.7071067811865476


def _round_up(x, m):
    return ((x + m - 1) // m) * m


def _erf_poly(x):
    """Abramowitz & Stegun 7.1.26 erf (|error| <= 1.5e-7 => erf-exact GELU at
    f32). Uses only exp + arithmetic, so it always lowers (EUP + VPU).
    If a v5e profile shows the VALU slot saturating, swap for
    jax.nn.gelu(approximate=True)."""
    p = 0.3275911
    c1, c2, c3, c4, c5 = (0.254829592, -0.284496736, 1.421413741,
                          -1.453152027, 1.061405429)
    s = jnp.where(x >= 0.0, 1.0, -1.0)
    z = jnp.abs(x)
    t = 1.0 / (1.0 + p * z)
    poly = ((((c5 * t + c4) * t + c3) * t + c2) * t + c1) * t
    return s * (1.0 - poly * jnp.exp(-z * z))


def _gcn_conv_kernel(*refs, ab, bb, n, fp):
    """One grid step = `bb` graphs (batches).

    ab=True : x_ref (bb,Np,F_in) bf16, w_ref (F_in,Fp) bf16,
              scale_ref (Np,1) f32, shiftb_ref (Np,Fp) f32,
              a_ref (Np,Np) bf16, o_ref (bb,Np,Fp) bf16
    ab=False: x_ref, w_ref, b_ref (1,Fp) f32, a_ref, o_ref
    """
    if ab:
        x_ref, w_ref, scale_ref, shiftb_ref, a_ref, o_ref = refs
    else:
        x_ref, w_ref, b_ref, a_ref, o_ref = refs

    f_in = x_ref.shape[-1]

    # Linear on the MXU: bf16 operands, f32 accumulation.  Np % 16 == 0 makes
    # the reshapes pure relabelings (no relayout).
    x2 = x_ref[...].reshape(bb * n, f_in)
    h = jnp.dot(x2, w_ref[...], preferred_element_type=jnp.float32)
    h = h.reshape(bb, n, fp)

    if ab:
        # Eval-mode BatchNorm1d folded together with the linear bias:
        #   (xW + b)*scale + shift == (xW)*scale + (scale*b + shift)
        h = h * scale_ref[...][None, :, :] + shiftb_ref[...][None, :, :]
        # Exact (erf-based) GELU, matching torch.nn.GELU() default.
        h = 0.5 * h * (1.0 + _erf_poly(h * _INV_SQRT2))
    else:
        h = h + b_ref[...][None, :, :]

    hb = h.astype(jnp.bfloat16)
    # Aggregation out[b] = A_hat @ h[b]: one batched MXU contraction (same A
    # for every batch).  Bandwidth-bound for small N; stacking batches along
    # lanes would raise MXU util further but is not the bottleneck here.
    a_b = jnp.broadcast_to(a_ref[...][None, :, :], (bb, n, n))
    out = jnp.einsum("bnm,bmf->bnf", a_b, hb,
                     preferred_element_type=jnp.float32)
    o_ref[...] = out.astype(o_ref.dtype)


def precompute_gcn_constants(edge_index, norm, params, node_nums, ab=True):
    """Batch-independent constants.  Build once / cache when the graph and
    weights are static (avoids re-doing the O(N^2) scatter each call)."""
    N = node_nums
    Wt = params["Wt"].astype(jnp.float32)            # (F_in, F_out)
    bias = params["b"].astype(jnp.float32)           # (F_out,)
    F_in, F_out = Wt.shape
    E = edge_index.shape[1]

    Fp = _round_up(F_out, 128)    # lane-dense output (unmasked vst)
    Np = _round_up(N, 16)         # bf16 sublane pack -> free in-kernel reshapes

    W_pad = jnp.zeros((F_in, Fp), jnp.float32).at[:, :F_out].set(Wt)

    # Normalized aggregation matrix: A_hat[n, m] = sum_{e: dst==n, src==m} norm[e]
    # Module semantics: gather from edge_index[1], scatter-add at edge_index[0].
    src = edge_index[1].astype(jnp.int32)
    dst = edge_index[0].astype(jnp.int32)
    a_hat = jnp.zeros((Np, Np), jnp.float32).at[dst, src].add(
        norm.reshape(E).astype(jnp.float32))

    consts = dict(F_out=F_out, Fp=Fp, Np=Np,
                  W_bf=W_pad.astype(jnp.bfloat16),
                  A_bf=a_hat.astype(jnp.bfloat16))
    if ab:
        scale = params["gamma"] / jnp.sqrt(params["running_var"] + BN_EPS)  # (N,)
        shift = params["beta"] - params["running_mean"] * scale             # (N,)
        shiftb = scale[:, None] * bias[None, :] + shift[:, None]            # (N,F_out)
        consts["scale_col"] = jnp.zeros((Np, 1), jnp.float32).at[:N, 0].set(scale)
        consts["shiftb"] = jnp.zeros((Np, Fp), jnp.float32).at[:N, :F_out].set(shiftb)
    else:
        consts["bias"] = jnp.zeros((1, Fp), jnp.float32).at[0, :F_out].set(bias)
    return consts


def gcn_conv_forward(x, edge_index, norm, params, ab=True, batch_block=None,
                     consts=None):
    B, N, F_in = x.shape
    if consts is None:
        consts = precompute_gcn_constants(edge_index, norm, params, N, ab=ab)
    F_out, Fp, Np = consts["F_out"], consts["Fp"], consts["Np"]

    # --- tile / grid selection ----------------------------------------------
    if batch_block is None:
        max_bb_rows = max(1, 1024 // Np)        # rows-per-step VMEM budget
        max_bb_steps = max(1, B // min(B, 8))   # keep >= min(B, 8) grid steps
        cap = max(1, min(B, max_bb_rows, max_bb_steps))
        batch_block = max(d for d in range(1, cap + 1) if B % d == 0)
    assert B % batch_block == 0, (B, batch_block)
    num_blocks = B // batch_block
    bb = batch_block

    # --- pad inputs -----------------------------------------------------------
    x_bf = x.astype(jnp.bfloat16)
    if Np != N:
        x_bf = jnp.zeros((B, Np, F_in), jnp.bfloat16).at[:, :N, :].set(x_bf)

    # --- explicit VMEM budget (v5e default scoped limit is only 16 MiB;
    #     stay under v7x's 64 MiB physical) -----------------------------------
    stream = 2 * (bb * Np * F_in * 2 + bb * Np * Fp * 2)    # double-buffered x/out
    resident = 2 * (F_in * Fp * 2 + Np * Np * 2 + Np * Fp * 4
                    + Np * 128 * 4 + Fp * 4)                # W, A, BN consts / bias
    scratch = bb * Np * Fp * (4 + 2) + bb * Np * Np * 2     # h f32, hb bf16, A bcast
    vmem_limit = int(min(56 * 2 ** 20,
                         max(32 * 2 ** 20, 2 * (stream + resident + scratch))))

    # --- specs ----------------------------------------------------------------
    # Constant-index inputs (W, BN consts, A_hat) are small and revisited every
    # step; pl.Buffered(1) single-buffering could trim a little more VMEM.
    if ab:
        extra_inputs = (consts["scale_col"], consts["shiftb"])
        extra_specs = [pl.BlockSpec((Np, 1), lambda i: (0, 0)),
                       pl.BlockSpec((Np, Fp), lambda i: (0, 0))]
    else:
        extra_inputs = (consts["bias"],)
        extra_specs = [pl.BlockSpec((1, Fp), lambda i: (0, 0))]

    in_specs = ([pl.BlockSpec((bb, Np, F_in), lambda i: (i, 0, 0)),
                 pl.BlockSpec((F_in, Fp), lambda i: (0, 0))]
                + extra_specs
                + [pl.BlockSpec((Np, Np), lambda i: (0, 0))])
    out_spec = pl.BlockSpec((bb, Np, Fp), lambda i: (i, 0, 0))

    kernel = functools.partial(_gcn_conv_kernel, ab=ab, bb=bb, n=Np, fp=Fp)

    flops = 2 * B * Np * F_in * Fp + 2 * B * Np * Np * Fp
    bytes_accessed = (B * Np * F_in * 2 + F_in * Fp * 2 + Np * Np * 2
                      + (Np * 4 + Np * Fp * 4 if ab else Fp * 4)
                      + B * Np * Fp * 2)
    cost = pl.CostEstimate(flops=int(flops),
                           transcendentals=int(B * Np * Fp if ab else 0),
                           bytes_accessed=int(bytes_accessed))

    out_padded = pl.pallas_call(
        kernel,
        out_shape=jax.ShapeDtypeStruct((B, Np, Fp), jnp.bfloat16),
        grid_spec=pltpu.PrefetchScalarGridSpec(
            num_scalar_prefetch=0,
            grid=(num_blocks,),
            in_specs=in_specs,
            out_specs=out_spec,
        ),
        compiler_params=pltpu.CompilerParams(
            dimension_semantics=("parallel",),
            vmem_limit_bytes=vmem_limit),
        cost_estimate=cost,
    )(x_bf, consts["W_bf"], *extra_inputs, consts["A_bf"])

    # Slice off node/feature padding; return f32 for module-interface parity.
    return out_padded[:, :N, :F_out].astype(jnp.float32)


def _reference_forward(x, edge_index, norm, params, ab=True):
    """Pure-JAX f32 reference matching the PyTorch forward (eval mode)."""
    h = jnp.einsum("bnf,fo->bno", x, params["Wt"],
                   precision=lax.Precision.HIGHEST) + params["b"]
    if ab:
        rm = params["running_mean"][None, :, None]
        rv = params["running_var"][None, :, None]
        g = params["gamma"][None, :, None]
        bt = params["beta"][None, :, None]
        h = (h - rm) / jnp.sqrt(rv + BN_EPS) * g + bt
        h = 0.5 * h * (1.0 + jsp_erf(h * _INV_SQRT2))
    msgs = h[:, edge_index[1], :] * norm[None, :, :]
    out = jnp.zeros_like(h).at[:, edge_index[0], :].add(msgs)
    return out


if __name__ == "__main__":
    # Small shapes consistent with the module: batch=2, node_nums=16,
    # input_num=8, out_num=32, num_edges=48.
    B, N, F_in, F_out, E = 2, 16, 8, 32, 48

    key = jax.random.PRNGKey(0)
    ks = jax.random.split(key, 10)
    x = jax.random.normal(ks[0], (B, N, F_in), jnp.float32)
    Wt = 0.2 * jax.random.normal(ks[1], (F_in, F_out), jnp.float32)
    b = 0.1 * jax.random.normal(ks[2], (F_out,), jnp.float32)
    gamma = 1.0 + 0.1 * jax.random.normal(ks[3], (N,), jnp.float32)
    beta = 0.1 * jax.random.normal(ks[4], (N,), jnp.float32)
    rmean = 0.1 * jax.random.normal(ks[5], (N,), jnp.float32)
    rvar = 1.0 + 0.2 * jax.random.uniform(ks[6], (N,), jnp.float32)
    edge_dst = jax.random.randint(ks[7], (E,), 0, N, jnp.int32)
    edge_src = jax.random.randint(ks[8], (E,), 0, N, jnp.int32)
    edge_index = jnp.stack([edge_dst, edge_src], axis=0)   # row0=dst, row1=src
    norm = jax.random.uniform(ks[9], (E, 1), jnp.float32)

    params = dict(Wt=Wt, b=b, gamma=gamma, beta=beta,
                  running_mean=rmean, running_var=rvar)

    fwd = jax.jit(functools.partial(gcn_conv_forward, ab=True))
    out = jax.block_until_ready(fwd(x, edge_index, norm, params))

    ref = _reference_forward(x, edge_index, norm, params, ab=True)
    assert out.shape == (B, N, F_out), out.shape
    max_err = float(jnp.max(jnp.abs(out - ref)))
    ref_scale = float(jnp.max(jnp.abs(ref)))
    # bf16 MXU operands / bf16 output with f32 accumulation.
    assert max_err <= 5e-2 * max(1.0, ref_scale), (
        f"max abs err too large: {max_err} (ref scale {ref_scale})")
    print("KERNEL_OK")
</pallas_src>

<mosaic_0001>
module attributes {stable_mosaic.version = 11 : i64} {
  func.func private @main(%arg0: i32) attributes {dimension_semantics = [#tpu.dimension_semantics<core_parallel>], iteration_bounds = array<i64: 2>, tpu.core_type = #tpu.core_type<sc_scalar_subcore>, window_params = []} {
    return
  }
}

module attributes {stable_mosaic.version = 11 : i64} {
  func.func private @main(%arg0: i32) attributes {dimension_semantics = [#tpu.dimension_semantics<core_parallel>], iteration_bounds = array<i64: 2>, tpu.core_type = #tpu.core_type<sc_scalar_subcore>, window_params = []} {
    return
  }
}

module attributes {stable_mosaic.version = 11 : i64} {
  func.func @_gcn_conv_kernel(%arg0: i32, %arg1: memref<1x16x8xbf16, #tpu.memory_space<vmem>>, %arg2: memref<8x128xbf16, #tpu.memory_space<vmem>>, %arg3: memref<16x1xf32, #tpu.memory_space<vmem>>, %arg4: memref<16x128xf32, #tpu.memory_space<vmem>>, %arg5: memref<16x16xbf16, #tpu.memory_space<vmem>>, %arg6: memref<1x16x128xbf16, #tpu.memory_space<vmem>>) attributes {dimension_semantics = [#tpu.dimension_semantics<parallel>], iteration_bounds = array<i64: 2>, scalar_prefetch = 0 : i64, scratch_operands = 0 : i64, tpu.core_type = #tpu.core_type<tc>, window_params = [{transform_indices = @transform_0, window_bounds = array<i64: 1, 16, 8>}, {pipeline_mode = #tpu.pipeline_mode<synchronous>, transform_indices = @transform_1, window_bounds = array<i64: 8, 128>}, {pipeline_mode = #tpu.pipeline_mode<synchronous>, transform_indices = @transform_2, window_bounds = array<i64: 16, 1>}, {pipeline_mode = #tpu.pipeline_mode<synchronous>, transform_indices = @transform_3, window_bounds = array<i64: 16, 128>}, {pipeline_mode = #tpu.pipeline_mode<synchronous>, transform_indices = @transform_4, window_bounds = array<i64: 16, 16>}, {transform_indices = @transform_5, window_bounds = array<i64: 1, 16, 128>}]} {
    %c0 = arith.constant 0 : index
    %c0_0 = arith.constant 0 : index
    %c0_1 = arith.constant 0 : index
    %0 = vector.load %arg1[%c0, %c0_0, %c0_1] : memref<1x16x8xbf16, #tpu.memory_space<vmem>>, vector<1x16x8xbf16>
    %1 = vector.shape_cast %0 : vector<1x16x8xbf16> to vector<16x8xbf16>
    %c0_2 = arith.constant 0 : index
    %c0_3 = arith.constant 0 : index
    %2 = vector.load %arg2[%c0_2, %c0_3] : memref<8x128xbf16, #tpu.memory_space<vmem>>, vector<8x128xbf16>
    %cst = arith.constant dense<0.000000e+00> : vector<16x128xf32>
    %3 = tpu.matmul %1, %2, %cst {dimension_numbers = #tpu.dot_dimension_numbers<[1], [0], [0], [1], [0, 0, 1, 1], [], []>} : vector<16x8xbf16>, vector<8x128xbf16>, vector<16x128xf32> -> vector<16x128xf32>
    %4 = vector.shape_cast %3 : vector<16x128xf32> to vector<1x16x128xf32>
    %c0_4 = arith.constant 0 : index
    %c0_5 = arith.constant 0 : index
    %5 = vector.load %arg3[%c0_4, %c0_5] : memref<16x1xf32, #tpu.memory_space<vmem>>, vector<16x1xf32>
    %6 = vector.shape_cast %5 : vector<16x1xf32> to vector<1x16x1xf32>
    %7 = vector.broadcast %6 : vector<1x16x1xf32> to vector<1x16x128xf32>
    %8 = arith.mulf %4, %7 : vector<1x16x128xf32>
    %c0_6 = arith.constant 0 : index
    %c0_7 = arith.constant 0 : index
    %9 = vector.load %arg4[%c0_6, %c0_7] : memref<16x128xf32, #tpu.memory_space<vmem>>, vector<16x128xf32>
    %10 = vector.shape_cast %9 : vector<16x128xf32> to vector<1x16x128xf32>
    %11 = arith.addf %8, %10 : vector<1x16x128xf32>
    %cst_8 = arith.constant 5.000000e-01 : f32
    %12 = vector.broadcast %cst_8 : f32 to vector<1x16x128xf32>
    %13 = arith.mulf %12, %11 : vector<1x16x128xf32>
    %cst_9 = arith.constant 0.707106769 : f32
    %14 = vector.broadcast %cst_9 : f32 to vector<1x16x128xf32>
    %15 = arith.mulf %11, %14 : vector<1x16x128xf32>
    %cst_10 = arith.constant 0.000000e+00 : f32
    %16 = vector.broadcast %cst_10 : f32 to vector<1x16x128xf32>
    %17 = arith.cmpf oge, %15, %16 : vector<1x16x128xf32>
    %cst_11 = arith.constant 1.000000e+00 : f32
    %cst_12 = arith.constant -1.000000e+00 : f32
    %18 = vector.broadcast %cst_11 : f32 to vector<1x16x128xf32>
    %19 = vector.broadcast %cst_12 : f32 to vector<1x16x128xf32>
    %20 = arith.select %17, %18, %19 : vector<1x16x128xi1>, vector<1x16x128xf32>
    %21 = math.absf %15 : vector<1x16x128xf32>
    %cst_13 = arith.constant 0.327591091 : f32
    %22 = vector.broadcast %cst_13 : f32 to vector<1x16x128xf32>
    %23 = arith.mulf %22, %21 : vector<1x16x128xf32>
    %cst_14 = arith.constant 1.000000e+00 : f32
    %24 = vector.broadcast %cst_14 : f32 to vector<1x16x128xf32>
    %25 = arith.addf %24, %23 : vector<1x16x128xf32>
    %cst_15 = arith.constant 1.000000e+00 : f32
    %26 = vector.broadcast %cst_15 : f32 to vector<1x16x128xf32>
    %27 = arith.divf %26, %25 : vector<1x16x128xf32>
    %cst_16 = arith.constant 1.06140542 : f32
    %28 = vector.broadcast %cst_16 : f32 to vector<1x16x128xf32>
    %29 = arith.mulf %28, %27 : vector<1x16x128xf32>
    %cst_17 = arith.constant -1.45315206 : f32
    %30 = vector.broadcast %cst_17 : f32 to vector<1x16x128xf32>
    %31 = arith.addf %29, %30 : vector<1x16x128xf32>
    %32 = arith.mulf %31, %27 : vector<1x16x128xf32>
    %cst_18 = arith.constant 1.42141378 : f32
    %33 = vector.broadcast %cst_18 : f32 to vector<1x16x128xf32>
    %34 = arith.addf %32, %33 : vector<1x16x128xf32>
    %35 = arith.mulf %34, %27 : vector<1x16x128xf32>
    %cst_19 = arith.constant -0.284496725 : f32
    %36 = vector.broadcast %cst_19 : f32 to vector<1x16x128xf32>
    %37 = arith.addf %35, %36 : vector<1x16x128xf32>
    %38 = arith.mulf %37, %27 : vector<1x16x128xf32>
    %cst_20 = arith.constant 0.254829586 : f32
    %39 = vector.broadcast %cst_20 : f32 to vector<1x16x128xf32>
    %40 = arith.addf %38, %39 : vector<1x16x128xf32>
    %41 = arith.mulf %40, %27 : vector<1x16x128xf32>
    %cst_21 = arith.constant 0.000000e+00 : f32
    %42 = vector.broadcast %cst_21 : f32 to vector<1x16x128xf32>
    %43 = arith.subf %42, %21 : vector<1x16x128xf32>
    %44 = arith.mulf %43, %21 : vector<1x16x128xf32>
    %45 = math.exp %44 : vector<1x16x128xf32>
    %46 = arith.mulf %41, %45 : vector<1x16x128xf32>
    %cst_22 = arith.constant 1.000000e+00 : f32
    %47 = vector.broadcast %cst_22 : f32 to vector<1x16x128xf32>
    %48 = arith.subf %47, %46 : vector<1x16x128xf32>
    %49 = arith.mulf %20, %48 : vector<1x16x128xf32>
    %cst_23 = arith.constant 1.000000e+00 : f32
    %50 = vector.broadcast %cst_23 : f32 to vector<1x16x128xf32>
    %51 = arith.addf %50, %49 : vector<1x16x128xf32>
    %52 = arith.mulf %13, %51 : vector<1x16x128xf32>
    %53 = arith.truncf %52 : vector<1x16x128xf32> to vector<1x16x128xbf16>
    %c0_24 = arith.constant 0 : index
    %c0_25 = arith.constant 0 : index
    %54 = vector.load %arg5[%c0_24, %c0_25] : memref<16x16xbf16, #tpu.memory_space<vmem>>, vector<16x16xbf16>
    %55 = vector.shape_cast %54 : vector<16x16xbf16> to vector<1x16x16xbf16>
    "tpu.trace_start"() <{level = 10 : i32, message = "bnm,bmf->bnf"}> : () -> ()
    %cst_26 = arith.constant dense<0.000000e+00> : vector<1x16x128xf32>
    %56 = tpu.matmul %55, %53, %cst_26 {dimension_numbers = #tpu.dot_dimension_numbers<[2], [1], [1], [2], [0, 0, 0, 1, 1, 2], [0], [0]>} : vector<1x16x16xbf16>, vector<1x16x128xbf16>, vector<1x16x128xf32> -> vector<1x16x128xf32>
    "tpu.trace_stop"() : () -> ()
    %57 = arith.truncf %56 : vector<1x16x128xf32> to vector<1x16x128xbf16>
    %c0_27 = arith.constant 0 : index
    %c0_28 = arith.constant 0 : index
    %c0_29 = arith.constant 0 : index
    %58 = vector.load %arg6[%c0_27, %c0_28, %c0_29] : memref<1x16x128xbf16, #tpu.memory_space<vmem>>, vector<1x16x128xbf16>
    tpu.vector_store %arg6[%c0_27, %c0_28, %c0_29], %57 {strides = array<i32>} : memref<1x16x128xbf16, #tpu.memory_space<vmem>>, vector<1x16x128xbf16>,
    return
  }
  func.func @transform_0(%arg0: i32) -> (i32, i32, i32) {
    %c0_i32 = arith.constant 0 : i32
    %c0_i32_0 = arith.constant 0 : i32
    %c0_i32_1 = arith.constant 0 : i32
    return %arg0, %c0_i32, %c0_i32_0 : i32, i32, i32
  }
  func.func @transform_1(%arg0: i32) -> (i32, i32) {
    %c0_i32 = arith.constant 0 : i32
    %c0_i32_0 = arith.constant 0 : i32
    %c0_i32_1 = arith.constant 0 : i32
    return %c0_i32, %c0_i32_0 : i32, i32
  }
  func.func @transform_2(%arg0: i32) -> (i32, i32) {
    %c0_i32 = arith.constant 0 : i32
    %c0_i32_0 = arith.constant 0 : i32
    %c0_i32_1 = arith.constant 0 : i32
    return %c0_i32, %c0_i32_0 : i32, i32
  }
  func.func @transform_3(%arg0: i32) -> (i32, i32) {
    %c0_i32 = arith.constant 0 : i32
    %c0_i32_0 = arith.constant 0 : i32
    %c0_i32_1 = arith.constant 0 : i32
    return %c0_i32, %c0_i32_0 : i32, i32
  }
  func.func @transform_4(%arg0: i32) -> (i32, i32) {
    %c0_i32 = arith.constant 0 : i32
    %c0_i32_0 = arith.constant 0 : i32
    %c0_i32_1 = arith.constant 0 : i32
    return %c0_i32, %c0_i32_0 : i32, i32
  }
  func.func @transform_5(%arg0: i32) -> (i32, i32, i32) {
    %c0_i32 = arith.constant 0 : i32
    %c0_i32_0 = arith.constant 0 : i32
    %c0_i32_1 = arith.constant 0 : i32
    return %arg0, %c0_i32, %c0_i32_0 : i32, i32, i32
  }
}

</mosaic_0001>

<llo_original>
// kernel: gcn_conv_forward.1
$region0: #{gcn_conv_forward.1}
  #allocation0 [shape = 'u32[]', space=smem, size = 0x4, offset = 0x4, fixed_abs, tag = 'smem constant byte address 0x4 - core index']
  #allocation1 [shape = 'u32[144,128]{1,0:T(1,128)}', space=vmem, size = 0x12000, scoped, tag = 'internal scratch']
  %s0 = inlined_call_operand.vmem [shape: bf16[2,16,8], index: 0, kind: input, shape index: {}]
  %s1 = inlined_call_operand.vmem [shape: bf16[8,128], index: 1, kind: input, shape index: {}]
  %s2 = inlined_call_operand.vmem [shape: f32[16,1], index: 2, kind: input, shape index: {}]
  %s3 = inlined_call_operand.vmem [shape: f32[16,128], index: 3, kind: input, shape index: {}]
  %s4 = inlined_call_operand.vmem [shape: bf16[16,16], index: 4, kind: input, shape index: {}]
  %s5 = inlined_call_operand.vmem [shape: bf16[2,16,128], index: 5, kind: output, shape index: {}]
  %s6 = sld [smem:[#allocation0]]
  $region53: #{gcn_conv_forward.1} parent=0
    _
  %s8 = ssub.s32 1, %s6
  %s9 = scalar_select 0, %s8, %s6
  loop: start=0, step=1, limit=4
  $region2: #{gcn_conv_forward.1} parent=0 // loop_pre_header
    _
  $region3: #{gcn_conv_forward.1} parent=0 // loop_header
    %s11 = sphi 0, %s15
    %p12 = scmp.ge.s32.totalorder %s11, 4
    %s21 = sphi 0, %s23
    %s24 = sphi 0, %s21
    %s25 = sphi 0, %s24
    %s41 = sphi 0, %s25
    %s45 = sphi 0, %s45
    %s47 = sphi 0, %s45
    %s48 = sphi 0, %s47
    %s62 = sphi 0, %s48
    %s66 = sphi 0, %s66
    %s68 = sphi 0, %s66
    %s69 = sphi 0, %s68
    %s83 = sphi 0, %s69
    %s87 = sphi 0, %s87
    %s89 = sphi 0, %s87
    %s90 = sphi 0, %s89
    %s104 = sphi 0, %s90
    %s108 = sphi 0, %s108
    %s110 = sphi 0, %s108
    %s111 = sphi 0, %s110
    %s125 = sphi 0, %s111
    %s131 = sphi 0, %s133
    %s134 = sphi 0, %s131
    %s135 = sphi 0, %s134
    %s151 = sphi 0, %s135
  $region4: #{gcn_conv_forward.1} parent=0 // loop_header_branch
    %14 = sbr.rel (%p12) target = $region8
  $region5: #{gcn_conv_forward.1} parent=0 // loop_body
    %s16 = ssub.s32 %s11, 1
    %s17 = ssub.s32 %s11, 2
    %s18 = sadd.s32 %s11, 1
    %s19 = ssub.s32 %s11, %s18
    %p20 = scmp.eq.s32.totalorder %s19, 0
    %s22 = sadd.s32 %s21, 1
    %s23 = scalar_select %p20, %s21, %s22
    %p26 = pneg %p20
    %p27 = scmp.eq.s32.totalorder %s11, 1
    %p28 = por %p26, %p27
    %p29 = scmp.ne.s32.totalorder %s21, %s24
    %p30 = scmp.eq.s32.totalorder %s11, 0
    %p31 = por %p29, %p30
    %p32 = scmp.ne.s32.totalorder %s21, %s24
    %p33 = scmp.eq.s32.totalorder %s16, 1
    %p34 = por %p32, %p33
    %p35 = scmp.ne.s32.totalorder %s24, %s25
    %p36 = scmp.eq.s32.totalorder %s16, 0
    %p37 = por %p35, %p36
    %p38 = scmp.ne.s32.totalorder %s24, %s25
    %p39 = scmp.eq.s32.totalorder %s17, 1
    %p40 = por %p38, %p39
    %p42 = scmp.ne.s32.totalorder %s25, %s41
    %p43 = scmp.eq.s32.totalorder %s17, 0
    %p44 = por %p42, %p43
    %s46 = sadd.s32 %s45, 1
    %p49 = scmp.eq.s32.totalorder %s11, 1
    %p50 = scmp.ne.s32.totalorder %s45, %s47
    %p51 = scmp.eq.s32.totalorder %s11, 0
    %p52 = por %p50, %p51
    %p53 = scmp.ne.s32.totalorder %s45, %s47
    %p54 = scmp.eq.s32.totalorder %s16, 1
    %p55 = por %p53, %p54
    %p56 = scmp.ne.s32.totalorder %s47, %s48
    %p57 = scmp.eq.s32.totalorder %s16, 0
    %p58 = por %p56, %p57
    %p59 = scmp.ne.s32.totalorder %s47, %s48
    %p60 = scmp.eq.s32.totalorder %s17, 1
    %p61 = por %p59, %p60
    %p63 = scmp.ne.s32.totalorder %s48, %s62
    %p64 = scmp.eq.s32.totalorder %s17, 0
    %p65 = por %p63, %p64
    %s67 = sadd.s32 %s66, 1
    %p70 = scmp.eq.s32.totalorder %s11, 1
    %p71 = scmp.ne.s32.totalorder %s66, %s68
    %p72 = scmp.eq.s32.totalorder %s11, 0
    %p73 = por %p71, %p72
    %p74 = scmp.ne.s32.totalorder %s66, %s68
    %p75 = scmp.eq.s32.totalorder %s16, 1
    %p76 = por %p74, %p75
    %p77 = scmp.ne.s32.totalorder %s68, %s69
    %p78 = scmp.eq.s32.totalorder %s16, 0
    %p79 = por %p77, %p78
    %p80 = scmp.ne.s32.totalorder %s68, %s69
    %p81 = scmp.eq.s32.totalorder %s17, 1
    %p82 = por %p80, %p81
    %p84 = scmp.ne.s32.totalorder %s69, %s83
    %p85 = scmp.eq.s32.totalorder %s17, 0
    %p86 = por %p84, %p85
    %s88 = sadd.s32 %s87, 1
    %p91 = scmp.eq.s32.totalorder %s11, 1
    %p92 = scmp.ne.s32.totalorder %s87, %s89
    %p93 = scmp.eq.s32.totalorder %s11, 0
    %p94 = por %p92, %p93
    %p95 = scmp.ne.s32.totalorder %s87, %s89
    %p96 = scmp.eq.s32.totalorder %s16, 1
    %p97 = por %p95, %p96
    %p98 = scmp.ne.s32.totalorder %s89, %s90
    %p99 = scmp.eq.s32.totalorder %s16, 0
    %p100 = por %p98, %p99
    %p101 = scmp.ne.s32.totalorder %s89, %s90
    %p102 = scmp.eq.s32.totalorder %s17, 1
    %p103 = por %p101, %p102
    %p105 = scmp.ne.s32.totalorder %s90, %s104
    %p106 = scmp.eq.s32.totalorder %s17, 0
    %p107 = por %p105, %p106
    %s109 = sadd.s32 %s108, 1
    %p112 = scmp.eq.s32.totalorder %s11, 1
    %p113 = scmp.ne.s32.totalorder %s108, %s110
    %p114 = scmp.eq.s32.totalorder %s11, 0
    %p115 = por %p113, %p114
    %p116 = scmp.ne.s32.totalorder %s108, %s110
    %p117 = scmp.eq.s32.totalorder %s16, 1
    %p118 = por %p116, %p117
    %p119 = scmp.ne.s32.totalorder %s110, %s111
    %p120 = scmp.eq.s32.totalorder %s16, 0
    %p121 = por %p119, %p120
    %p122 = scmp.ne.s32.totalorder %s110, %s111
    %p123 = scmp.eq.s32.totalorder %s17, 1
    %p124 = por %p122, %p123
    %p126 = scmp.ne.s32.totalorder %s111, %s125
    %p127 = scmp.eq.s32.totalorder %s17, 0
    %p128 = por %p126, %p127
    %s129 = ssub.s32 %s11, %s18
    %p130 = scmp.eq.s32.totalorder %s129, 0
    %s132 = sadd.s32 %s131, 1
    %s133 = scalar_select %p130, %s131, %s132
    %p136 = pneg %p130
    %p137 = scmp.eq.s32.totalorder %s11, 1
    %p138 = por %p136, %p137
    %p139 = scmp.ne.s32.totalorder %s131, %s134
    %p140 = scmp.eq.s32.totalorder %s11, 0
    %p141 = por %p139, %p140
    %p142 = scmp.ne.s32.totalorder %s131, %s134
    %p143 = scmp.eq.s32.totalorder %s16, 1
    %p144 = por %p142, %p143
    %p145 = scmp.ne.s32.totalorder %s134, %s135
    %p146 = scmp.eq.s32.totalorder %s16, 0
    %p147 = por %p145, %p146
    %p148 = scmp.ne.s32.totalorder %s134, %s135
    %p149 = scmp.eq.s32.totalorder %s17, 1
    %p150 = por %p148, %p149
    %p152 = scmp.ne.s32.totalorder %s135, %s151
    %p153 = scmp.eq.s32.totalorder %s17, 0
    %p154 = por %p152, %p153
    %p155 = scmp.le.s32.totalorder 1, %s11
    %p156 = scmp.lt.s32.totalorder %s11, 3
    %p157 = pnand %p155, %p156
    %p158 = pneg %p157
    // Predicated region
    $region9: #{gcn_conv_forward.1} parent=5 // pred_check
      _
    $region10: #{gcn_conv_forward.1} parent=5 // pred_check_branch
      %160 = sbr.rel (%p157) target = $region12
    $region11: #{gcn_conv_forward.1} parent=5 // pred_region
      %s161 = ssub.s32 %s11, 1
      // Predicated region
      $region13: #{gcn_conv_forward.1} parent=11 // pred_check
        %p162 = pneg %p58
      $region14: #{gcn_conv_forward.1} parent=11 // pred_check_branch
        %164 = sbr.rel (%p162) target = $region16
      $region15: #{gcn_conv_forward.1} parent=11 // pred_region
        _
      $region16: #{gcn_conv_forward.1} parent=11 // pred_fallthru
        _
      // Predicated region
      $region17: #{gcn_conv_forward.1} parent=11 // pred_check
        %p165 = pneg %p79
      $region18: #{gcn_conv_forward.1} parent=11 // pred_check_branch
        %167 = sbr.rel (%p165) target = $region20
      $region19: #{gcn_conv_forward.1} parent=11 // pred_region
        _
      $region20: #{gcn_conv_forward.1} parent=11 // pred_fallthru
        _
      // Predicated region
      $region21: #{gcn_conv_forward.1} parent=11 // pred_check
        %p168 = pneg %p100
      $region22: #{gcn_conv_forward.1} parent=11 // pred_check_branch
        %170 = sbr.rel (%p168) target = $region24
      $region23: #{gcn_conv_forward.1} parent=11 // pred_region
        _
      $region24: #{gcn_conv_forward.1} parent=11 // pred_fallthru
        _
      // Predicated region
      $region25: #{gcn_conv_forward.1} parent=11 // pred_check
        %p171 = pneg %p121
      $region26: #{gcn_conv_forward.1} parent=11 // pred_check_branch
        %173 = sbr.rel (%p171) target = $region28
      $region27: #{gcn_conv_forward.1} parent=11 // pred_region
        _
      $region28: #{gcn_conv_forward.1} parent=11 // pred_fallthru
        _
    $region12: #{gcn_conv_forward.1} parent=5 // pred_fallthru
      _
    %p174 = scmp.lt.s32.totalorder %s11, 2
    // Predicated region
    $region29: #{gcn_conv_forward.1} parent=5 // pred_check
      %p175 = pneg %p174
    $region30: #{gcn_conv_forward.1} parent=5 // pred_check_branch
      %177 = sbr.rel (%p175) target = $region32
    $region31: #{gcn_conv_forward.1} parent=5 // pred_region
      // Predicated region
      $region33: #{gcn_conv_forward.1} parent=31 // pred_check
        %p178 = pneg %p31
      $region34: #{gcn_conv_forward.1} parent=31 // pred_check_branch
        %180 = sbr.rel (%p178) target = $region36
      $region35: #{gcn_conv_forward.1} parent=31 // pred_region
        %p181 = scmp.lt.s32.totalorder %s11, 1
        %s182 = scalar_select %p181, %s11, 1
        %s183 = smul.addr %s182, 2
        %s184 = smul.addr %s183, 4
        %s185 = scalar_lea.vmem %s0, %s184
      $region36: #{gcn_conv_forward.1} parent=31 // pred_fallthru
        _
    $region32: #{gcn_conv_forward.1} parent=5 // pred_fallthru
      _
    %p186 = scmp.le.s32.totalorder 1, %s11
    %p187 = scmp.lt.s32.totalorder %s11, 3
    %p188 = pnand %p186, %p187
    %p189 = pneg %p188
    // Predicated region
    $region37: #{gcn_conv_forward.1} parent=5 // pred_check
      _
    $region38: #{gcn_conv_forward.1} parent=5 // pred_check_branch
      %191 = sbr.rel (%p188) target = $region40
    $region39: #{gcn_conv_forward.1} parent=5 // pred_region
      %s192 = ssub.s32 %s11, 1
      %p193 = scmp.lt.s32.totalorder %s16, 1
      %s194 = scalar_select %p193, %s16, 1
      %s195 = smul.addr %s194, 2
      %s196 = smul.addr %s195, 4
      %s197 = scalar_lea.vmem %s0, %s196
      %p198 = pneg %p37
      %p199 = pneg %p34
      %p200 = pneg %p58
      %p201 = pneg %p55
      %p202 = pneg %p79
      %p203 = pneg %p76
      %p204 = pneg %p100
      %p205 = pneg %p97
      %p206 = pneg %p121
      %p207 = pneg %p118
      %p208 = pneg %p147
      %p209 = pneg %p144
      %p210 = scmp.lt.s32.totalorder %s16, 1
      %s211 = scalar_select %p210, %s16, 1
      %s212 = smul.addr %s211, 2
      %s213 = smul.addr %s212, 4
      %s214 = scalar_lea.vmem %s5, %s213
      %p215 = scmp.lt.s32.totalorder %s16, 1
      %s216 = scalar_select %p215, %s16, 1
      %s217 = smul.addr %s216, 2
      %s218 = smul.addr %s217, 4
      %s219 = scalar_lea.vmem %s0, %s218
      %p220 = scmp.lt.s32.totalorder %s16, 1
      %s221 = scalar_select %p220, %s16, 1
      %s222 = smul.addr %s221, 2
      %s223 = smul.addr %s222, 4
      %s224 = scalar_lea.vmem %s5, %s223
      %v226 = vld [vmem:[%s219] sm:$0xf]
      %v227 = vld [vmem:[%s219 + $0x4] sm:$0xf]
      %v228 = vld [vmem:[%s1] sm:$0xf]
      %v231 = vunpack.c.l.b16 %v226
      %v232 = vunpack.c.l.b16 %v227
      %v233 = vpack.c.b16 %v232, %v231
      %vm234 = vcmask 64512
      %v236 = vsel %vm234, %v233, 0
      %vm238 = vcmask 1043456
      %v240 = vsel %vm238, %v228, 0
      %242 = vmatprep.subr.bf16.mxu0 0
      %243 = vmatpush1.bf16.msra.mxu0 %v240
      %244 = vmatprep.subr.bf16.mxu0 0
      %245 = vmatpush1.bf16.msra.mxu0 0
      %246 = vmatprep.subr.bf16.mxu0 0
      %247 = vmatpush1.bf16.msra.mxu0 0
      %248 = vmatprep.subr.bf16.mxu0 0
      %249 = vmatpush1.bf16.msra.mxu0 0
      %250 = vmatprep.subr.bf16.mxu0 0
      %251 = vmatpush1.bf16.msra.mxu0 0
      %252 = vmatprep.subr.bf16.mxu0 0
      %253 = vmatpush1.bf16.msra.mxu0 0
      %254 = vmatprep.subr.bf16.mxu0 0
      %255 = vmatpush1.bf16.msra.mxu0 0
      %256 = vmatprep.subr.bf16.mxu0 0
      %257 = vmatpush1.bf16.msra.mxu0 0
      %258 = vmatprep.subr.bf16.mxu0 0
      %259 = vmatpush1.bf16.msra.mxu0 0
      %260 = vmatprep.subr.bf16.mxu0 0
      %261 = vmatpush1.bf16.msra.mxu0 0
      %262 = vmatprep.subr.bf16.mxu0 0
      %263 = vmatpush1.bf16.msra.mxu0 0
      %264 = vmatprep.subr.bf16.mxu0 0
      %265 = vmatpush1.bf16.msra.mxu0 0
      %266 = vmatprep.subr.bf16.mxu0 0
      %267 = vmatpush1.bf16.msra.mxu0 0
      %268 = vmatprep.subr.bf16.mxu0 0
      %269 = vmatpush1.bf16.msra.mxu0 0
      %270 = vmatprep.subr.bf16.mxu0 0
      %271 = vmatpush1.bf16.msra.mxu0 0
      %272 = vmatprep.subr.bf16.mxu0 0
      %273 = vmatpush1.bf16.msra.mxu0 0
      %274 = vmatprep.mubr.bf16.mxu0 0
      %275 = vmatmul.mubr.bf16.gmra.mrb[0].mxu0 %v236
      %v276 = vpop.f32.mrb[0].mxu0
      %v277 = vadd.f32 0.0, %v276
      %v278 = vpop.f32.mrb[0].mxu0
      %v279 = vpop.f32.mrb[0].mxu0
      %v280 = vadd.f32 0.0, %v279
      %v281 = vpop.f32.mrb[0].mxu0
      %282 = vdwg.mxu0
      %v283 = vld [vmem:[%s2] sm:$0xff]
      %v284 = vld [vmem:[%s2 + $0x8] sm:$0xff]
      %286 = vset.pattern.permute.xlu0 0
      %287 = vperm.xlu0 %286, %v283
      %v288 = vpop.permute.xlu0 %287
      %291 = vset.pattern.permute.xlu0 0
      %292 = vperm.xlu0 %291, %v284
      %v293 = vpop.permute.xlu0 %292
      %v295 = vmul.f32 %v277, %v288
      %v296 = vmul.f32 %v280, %v293
      %v297 = vld [vmem:[%s3] sm:$0xff]
      %v298 = vld [vmem:[%s3 + $0x8] sm:$0xff]
      %v299 = vadd.f32 %v295, %v297
      %v300 = vadd.f32 %v296, %v298
      %v301 = vmul.f32 %v299, 0.5
      %v302 = vmul.f32 %v300, 0.5
      %v303 = vmul.f32 %v299, 0.70710677
      %v304 = vmul.f32 %v300, 0.70710677
      %vm305 = vcmp.ge.f32.partialorder %v303, 0.0
      %vm306 = vcmp.ge.f32.partialorder %v304, 0.0
      %v307 = vsel %vm305, 1.0, -1.0
      %v308 = vsel %vm306, 1.0, -1.0
      %v309 = vand.u32 2147483647, %v303
      %v310 = vand.u32 2147483647, %v304
      %v311 = vmul.f32 %v309, 0.3275911
      %v312 = vmul.f32 %v310, 0.3275911
      %v313 = vadd.f32 %v311, 1.0
      %v314 = vadd.f32 %v312, 1.0
      %v315 = vrcp.pop %v313
      %v316 = vmul.f32 1.0, %v315
      %v317 = vrcp.pop %v314
      %v318 = vmul.f32 1.0, %v317
      %v319 = vmul.f32 %v316, 1.0614054
      %v320 = vmul.f32 %v318, 1.0614054
      %v321 = vadd.f32 %v319, -1.4531521
      %v322 = vadd.f32 %v320, -1.4531521
      %v323 = vmul.f32 %v321, %v316
      %v324 = vmul.f32 %v322, %v318
      %v325 = vadd.f32 %v323, 1.4214138
      %v326 = vadd.f32 %v324, 1.4214138
      %v327 = vmul.f32 %v325, %v316
      %v328 = vmul.f32 %v326, %v318
      %v329 = vadd.f32 %v327, -0.28449672
      %v330 = vadd.f32 %v328, -0.28449672
      %v331 = vmul.f32 %v329, %v316
      %v332 = vmul.f32 %v330, %v318
      %v333 = vadd.f32 %v331, 0.2548296
      %v334 = vadd.f32 %v332, 0.2548296
      %v335 = vmul.f32 %v333, %v316
      %v336 = vmul.f32 %v334, %v318
      %v337 = vsub.f32 0.0, %v309
      %v338 = vsub.f32 0.0, %v310
      %v339 = vmul.f32 %v337, %v309
      %v340 = vmul.f32 %v338, %v310
      %v341 = vmul.f32 %v339, 1.442695
      %v342 = vpow.pop %v341
      %v343 = vmul.f32 %v340, 1.442695
      %v344 = vpow.pop %v343
      %v345 = vmul.f32 %v335, %v342
      %v346 = vmul.f32 %v336, %v344
      %v347 = vsub.f32 1.0, %v345
      %v348 = vsub.f32 1.0, %v346
      %v349 = vmul.f32 %v307, %v347
      %v350 = vmul.f32 %v308, %v348
      %v351 = vadd.f32 %v349, 1.0
      %v352 = vadd.f32 %v350, 1.0
      %v353 = vmul.f32 %v301, %v351
      %v354 = vmul.f32 %v302, %v352
      %v355 = vpack.c.bf16 %v354, %v353
      %v356 = vld [vmem:[%s4] sm:$0xf]
      %v357 = vld [vmem:[%s4 + $0x4] sm:$0xf]
      %v360 = vunpack.c.l.b16 %v356
      %v361 = vunpack.c.l.b16 %v357
      %v362 = vpack.c.b16 %v361, %v360
      %vm363 = vcmask 130048
      %v365 = vsel %vm363, %v362, 0
      %367 = vmatprep.subr.bf16.mxu0 0
      %368 = vmatpush1.bf16.msra.mxu0 %v355
      %369 = vmatprep.subr.bf16.mxu0 0
      %370 = vmatpush1.bf16.msra.mxu0 0
      %371 = vmatprep.subr.bf16.mxu0 0
      %372 = vmatpush1.bf16.msra.mxu0 0
      %373 = vmatprep.subr.bf16.mxu0 0
      %374 = vmatpush1.bf16.msra.mxu0 0
      %375 = vmatprep.subr.bf16.mxu0 0
      %376 = vmatpush1.bf16.msra.mxu0 0
      %377 = vmatprep.subr.bf16.mxu0 0
      %378 = vmatpush1.bf16.msra.mxu0 0
      %379 = vmatprep.subr.bf16.mxu0 0
      %380 = vmatpush1.bf16.msra.mxu0 0
      %381 = vmatprep.subr.bf16.mxu0 0
      %382 = vmatpush1.bf16.msra.mxu0 0
      %383 = vmatprep.subr.bf16.mxu0 0
      %384 = vmatpush1.bf16.msra.mxu0 0
      %385 = vmatprep.subr.bf16.mxu0 0
      %386 = vmatpush1.bf16.msra.mxu0 0
      %387 = vmatprep.subr.bf16.mxu0 0
      %388 = vmatpush1.bf16.msra.mxu0 0
      %389 = vmatprep.subr.bf16.mxu0 0
      %390 = vmatpush1.bf16.msra.mxu0 0
      %391 = vmatprep.subr.bf16.mxu0 0
      %392 = vmatpush1.bf16.msra.mxu0 0
      %393 = vmatprep.subr.bf16.mxu0 0
      %394 = vmatpush1.bf16.msra.mxu0 0
      %395 = vmatprep.subr.bf16.mxu0 0
      %396 = vmatpush1.bf16.msra.mxu0 0
      %397 = vmatprep.subr.bf16.mxu0 0
      %398 = vmatpush1.bf16.msra.mxu0 0
      %399 = vmatprep.mubr.bf16.mxu0 0
      %400 = vmatmul.mubr.bf16.gmra.mrb[0].mxu0 %v365
      %v401 = vpop.f32.mrb[0].mxu0
      %v402 = vadd.f32 0.0, %v401
      %v403 = vpop.f32.mrb[0].mxu0
      %v404 = vpop.f32.mrb[0].mxu0
      %v405 = vadd.f32 0.0, %v404
      %v406 = vpop.f32.mrb[0].mxu0
      %407 = vdwg.mxu0
      %v408 = vpack.c.bf16 %v405, %v402
      %v410 = vunpack.c.l.b16 %v408
      %v411 = vunpack.c.h.b16 %v408
      %v412 = vpack.c.b16 %v410, %v410
      %v413 = vpack.c.b16 %v411, %v411
      %416 = vst [vmem:[%s224] sm:$0xf] %v412
      %417 = vst [vmem:[%s224 + $0x4] sm:$0xf] %v413
      %p418 = scmp.lt.s32.totalorder %s16, 1
      %s419 = scalar_select %p418, %s16, 1
      %s420 = smul.addr %s419, 2
      %s421 = smul.addr %s420, 4
      %s422 = scalar_lea.vmem %s5, %s421
      // Predicated region
      $region41: #{gcn_conv_forward.1} parent=39 // pred_check
        %p423 = pneg %p144
      $region42: #{gcn_conv_forward.1} parent=39 // pred_check_branch
        %425 = sbr.rel (%p423) target = $region44
      $region43: #{gcn_conv_forward.1} parent=39 // pred_region
        _
      $region44: #{gcn_conv_forward.1} parent=39 // pred_fallthru
        _
    $region40: #{gcn_conv_forward.1} parent=5 // pred_fallthru
      _
    %p426 = scmp.le.s32.totalorder 2, %s11
    // Predicated region
    $region45: #{gcn_conv_forward.1} parent=5 // pred_check
      %p427 = pneg %p426
    $region46: #{gcn_conv_forward.1} parent=5 // pred_check_branch
      %429 = sbr.rel (%p427) target = $region48
    $region47: #{gcn_conv_forward.1} parent=5 // pred_region
      %s430 = ssub.s32 %s11, 2
      // Predicated region
      $region49: #{gcn_conv_forward.1} parent=47 // pred_check
        %p431 = pneg %p150
      $region50: #{gcn_conv_forward.1} parent=47 // pred_check_branch
        %433 = sbr.rel (%p431) target = $region52
      $region51: #{gcn_conv_forward.1} parent=47 // pred_region
        %p434 = scmp.lt.s32.totalorder %s17, 1
        %s435 = scalar_select %p434, %s17, 1
        %s436 = smul.addr %s435, 2
        %s437 = smul.addr %s436, 4
        %s438 = scalar_lea.vmem %s5, %s437
      $region52: #{gcn_conv_forward.1} parent=47 // pred_fallthru
        _
    $region48: #{gcn_conv_forward.1} parent=5 // pred_fallthru
      _
  $region6: #{gcn_conv_forward.1} parent=0 // loop_footer
    %s15 = sadd.s32 1, %s11
  $region7: #{gcn_conv_forward.1} parent=0 // loop_footer_branch
    %10 = sbr.rel target = $region3
  $region8: #{gcn_conv_forward.1} parent=0 // loop_exit
    _

</llo_original>
